<compile_context>
chip_gen: v7x
topology: tpu7x:2x2x1
jax: 0.10.0
libtpu: 0.0.40
codegen_flags: <defaults>
</compile_context>

<pallas_src>
import functools

import jax
import jax.numpy as jnp
import numpy as np
from jax import lax
from jax.experimental import pallas as pl
from jax.experimental.pallas import tpu as pltpu


def _round_up(n, m):
    return ((n + m - 1) // m) * m


def _pick_batch_block(B):
    """Largest divisor of B that still leaves >=2 grid steps (v7x megacore)."""
    min_steps = 2 if B >= 2 else 1
    for nb in range(B, 0, -1):
        if B % nb == 0 and B // nb >= min_steps:
            return nb
    return 1


def convrnn_cell_kernel(wg_ref, x_ref, h_ref, o_ref, patch_ref, *,
                        H, W, kH, kW, Cin, hid, Cpx, Cph, NB, bias_row):
    """NB batch elements per grid step.

    wg_ref:    (hid, K_tot)        folded cc_g weights (+bias column), VMEM-resident
    x_ref:     (NB, Cin, M)        raw flattened input block,  M = H*W
    h_ref:     (NB, hid, M)        raw flattened hidden-state block
    o_ref:     (NB, hid, M)        g = tanh(cc_g), lane-dense per batch element
    patch_ref: (K_tot, NB*M) VMEM  im2col patches built in-kernel
                 row layout: tap-major groups of Kg = Cpx+Cph rows
                 [x ch 0..Cin-1 | zeros | h ch 0..hid-1 | zeros], plus a
                 constant-1 bias row at `bias_row`.
    """
    M = H * W
    Kg = Cpx + Cph
    padH, padW = kH // 2, kW // 2
    t0 = padH * kW + padW                       # the dy = dx = 0 tap
    dt = patch_ref.dtype

    # Per-output-pixel flat index / x-coordinate; built once per step and
    # reused by every tap and batch element.  (Height validity only needs
    # comparisons on the flat index, so no integer division is required.)
    idx = lax.broadcasted_iota(jnp.int32, (1, M), 1)
    xw = idx % W

    masks = []                                  # bool (1, M) per tap, or None
    for ky in range(kH):
        for kx in range(kW):
            dy, dx = ky - padH, kx - padW
            conds = []
            if dy < 0:
                conds.append(idx >= (-dy) * W)      # y + dy >= 0
            if dy > 0:
                conds.append(idx < (H - dy) * W)    # y + dy <  H
            if dx < 0:
                conds.append(xw >= -dx)             # x + dx >= 0
            if dx > 0:
                conds.append(xw < W - dx)           # x + dx <  W
            m = None
            for c in conds:
                m = c if m is None else jnp.logical_and(m, c)
            masks.append(m)

    for nb in range(NB):
        c0 = nb * M
        r0 = t0 * Kg
        # Stage this batch element's zero-channel-padded [x; h] image directly
        # into the centre tap's patch rows (shift 0, no mask needed there),
        # then read it back and derive every other tap from the resident value.
        patch_ref[r0:r0 + Cin, c0:c0 + M] = x_ref[nb]
        if Cpx > Cin:
            patch_ref[r0 + Cin:r0 + Cpx, c0:c0 + M] = jnp.zeros(
                (Cpx - Cin, M), dt)
        patch_ref[r0 + Cpx:r0 + Cpx + hid, c0:c0 + M] = h_ref[nb]
        if Cph > hid:
            patch_ref[r0 + Cpx + hid:r0 + Kg, c0:c0 + M] = jnp.zeros(
                (Cph - hid, M), dt)
        xh = patch_ref[r0:r0 + Kg, c0:c0 + M]        # (Kg, M), tile-aligned

        for ky in range(kH):
            for kx in range(kW):
                t = ky * kW + kx
                if t == t0:
                    continue                          # already in place
                dy, dx = ky - padH, kx - padW
                shift = (-(dy * W + dx)) % M          # circular lane roll
                tap = pltpu.roll(xh, shift=shift, axis=1)
                if masks[t] is not None:
                    tap = jnp.where(masks[t], tap, 0)
                patch_ref[t * Kg:(t + 1) * Kg, c0:c0 + M] = tap

    # Bias ones-row.  Written *after* the tap stores (it reuses a zero-pad
    # channel row when one exists), every step, so it is megacore-safe.
    patch_ref[bias_row:bias_row + 1, :] = jnp.ones((1, NB * M), dt)

    # Single MXU contraction over K_tot with f32 accumulation; tanh on the EUP.
    acc = jnp.dot(wg_ref[...], patch_ref[...],
                  preferred_element_type=jnp.float32)     # (hid, NB*M)
    g = jnp.tanh(acc)
    for nb in range(NB):
        o_ref[nb] = g[:, nb * M:(nb + 1) * M].astype(o_ref.dtype)


def conv_rnn_cell_forward(x_nchw, h_nchw, c_nchw, weight_oihw, bias,
                          kernel_size, *, compute_dtype=None, batch_block=None):
    """Pallas-backed ConvRNNCell.forward.  Returns (h_next, c_next) in NCHW."""
    del c_nchw  # c_cur is unused by the reference module's forward
    B, Cin, H, W = x_nchw.shape
    hid = h_nchw.shape[1]
    kH, kW = kernel_size
    ntaps = kH * kW
    M = H * W

    dt = jnp.dtype(compute_dtype) if compute_dtype is not None else x_nchw.dtype
    Cpx = _round_up(Cin, 8)                  # in-VMEM channel pad (not in HBM)
    Cph = _round_up(hid, 8)
    Kg = Cpx + Cph
    K_data = ntaps * Kg

    # Bias row: reuse an existing zero-pad channel row of tap 0 when one
    # exists; otherwise append a single extra patch row.
    if Cin < Cpx:
        bias_row = Cin
    elif hid < Cph:
        bias_row = Cpx + hid
    else:
        bias_row = K_data
    K_tot = K_data + (1 if bias_row == K_data else 0)

    NB = batch_block if batch_block is not None else _pick_batch_block(B)
    if B % NB != 0:
        raise ValueError(f"batch_block={NB} must divide batch size {B}")
    n_steps = B // NB

    # --- glue: free reshapes only (no pads / concat / im2col in HBM) ---------
    x_flat = x_nchw.reshape(B, Cin, M).astype(dt)
    h_flat = h_nchw.reshape(B, hid, M).astype(dt)

    # Fold weights for the cc_g slice only, tap-major / channel-minor rows
    # matching the in-kernel patch layout, with the bias in column `bias_row`.
    w_g = weight_oihw[3 * hid:4 * hid]                       # (hid, Cin+hid, kH, kW)
    w_x = jnp.pad(w_g[:, :Cin], ((0, 0), (0, Cpx - Cin), (0, 0), (0, 0)))
    w_h = jnp.pad(w_g[:, Cin:], ((0, 0), (0, Cph - hid), (0, 0), (0, 0)))
    w_cat = jnp.concatenate([w_x, w_h], axis=1)              # (hid, Kg, kH, kW)
    w_flat = jnp.transpose(w_cat, (0, 2, 3, 1)).reshape(hid, K_data)
    b_g = bias[3 * hid:4 * hid].astype(w_flat.dtype)
    if bias_row < K_data:
        wg = w_flat.at[:, bias_row].set(b_g)                 # spare zero column
    else:
        wg = jnp.concatenate([w_flat, b_g[:, None]], axis=1)
    wg = wg.astype(dt)

    # --- hot path: Pallas kernel ---------------------------------------------
    kernel = functools.partial(convrnn_cell_kernel, H=H, W=W, kH=kH, kW=kW,
                               Cin=Cin, hid=hid, Cpx=Cpx, Cph=Cph, NB=NB,
                               bias_row=bias_row)
    g_flat = pl.pallas_call(
        kernel,
        out_shape=jax.ShapeDtypeStruct((B, hid, M), x_nchw.dtype),
        grid_spec=pltpu.PrefetchScalarGridSpec(
            num_scalar_prefetch=0,
            grid=(n_steps,),
            in_specs=[
                pl.BlockSpec((hid, K_tot), lambda b: (0, 0)),   # VMEM-resident
                pl.BlockSpec((NB, Cin, M), lambda b: (b, 0, 0)),
                pl.BlockSpec((NB, hid, M), lambda b: (b, 0, 0)),
            ],
            out_specs=pl.BlockSpec((NB, hid, M), lambda b: (b, 0, 0)),
            scratch_shapes=[pltpu.VMEM((K_tot, NB * M), dt)],
        ),
        compiler_params=pltpu.CompilerParams(
            dimension_semantics=("parallel",)),
    )(wg, x_flat, h_flat)

    g_nchw = g_flat.reshape(B, hid, H, W)    # free: output is already (b, c, m)
    return g_nchw, g_nchw                    # h_next = c_next = g


if __name__ == "__main__":
    # Module config (synthetic, deterministic init).
    B, Cin, H, W = 2, 4, 16, 16
    hidden_dim = 8
    kernel_size = (3, 3)
    Ct = Cin + hidden_dim
    Cout = 4 * hidden_dim

    key = jax.random.PRNGKey(0)
    kw_, kb_, kx_, kh_, kc_ = jax.random.split(key, 5)

    # Conv2d(in=Ct, out=4*hid, k=3, pad=1, bias=True) parameters, OIHW.
    fan_in = Ct * kernel_size[0] * kernel_size[1]
    bound = 1.0 / np.sqrt(fan_in)
    weight = jax.random.uniform(kw_, (Cout, Ct, *kernel_size),
                                minval=-bound, maxval=bound, dtype=jnp.float32)
    bias = jax.random.uniform(kb_, (Cout,), minval=-bound, maxval=bound,
                              dtype=jnp.float32)

    # Inputs (NCHW, matching PyTorch convention).
    x = jax.random.normal(kx_, (B, Cin, H, W), dtype=jnp.float32)
    h0 = jax.random.normal(kh_, (B, hidden_dim, H, W), dtype=jnp.float32)
    c0 = jax.random.normal(kc_, (B, hidden_dim, H, W), dtype=jnp.float32)

    h_next, c_next = conv_rnn_cell_forward(x, h0, c0, weight, bias,
                                           kernel_size)
    jax.block_until_ready((h_next, c_next))

    # Pure-JAX reference (same math as the PyTorch module).
    combined = jnp.concatenate([x, h0], axis=1)
    conv_ref = jax.lax.conv_general_dilated(
        combined, weight, window_strides=(1, 1), padding="SAME",
        dimension_numbers=("NCHW", "OIHW", "NCHW"))
    conv_ref = conv_ref + bias.reshape(1, Cout, 1, 1)
    g_ref = jnp.tanh(conv_ref[:, 3 * hidden_dim:4 * hidden_dim])

    np.testing.assert_allclose(np.asarray(h_next), np.asarray(g_ref),
                               rtol=1e-5, atol=1e-5)
    np.testing.assert_allclose(np.asarray(c_next), np.asarray(g_ref),
                               rtol=1e-5, atol=1e-5)
    print("KERNEL_OK")
</pallas_src>

<mosaic_0001>
module attributes {stable_mosaic.version = 11 : i64} {
  func.func @convrnn_cell_kernel(%arg0: i32, %arg1: memref<8x144xf32, #tpu.memory_space<vmem>>, %arg2: memref<1x4x256xf32, #tpu.memory_space<vmem>>, %arg3: memref<1x8x256xf32, #tpu.memory_space<vmem>>, %arg4: memref<1x8x256xf32, #tpu.memory_space<vmem>>, %arg5: memref<144x256xf32, #tpu.memory_space<vmem>>) attributes {dimension_semantics = [#tpu.dimension_semantics<parallel>], iteration_bounds = array<i64: 2>, scalar_prefetch = 0 : i64, scratch_operands = 1 : i64, tpu.core_type = #tpu.core_type<tc>, window_params = [{pipeline_mode = #tpu.pipeline_mode<synchronous>, transform_indices = @transform_0, window_bounds = array<i64: 8, 144>}, {transform_indices = @transform_1, window_bounds = array<i64: 1, 4, 256>}, {transform_indices = @transform_2, window_bounds = array<i64: 1, 8, 256>}, {transform_indices = @transform_3, window_bounds = array<i64: 1, 8, 256>}]} {
    %0 = tpu.iota {dimensions = array<i32: 1>} : vector<1x256xi32>
    %c16_i32 = arith.constant 16 : i32
    %c0_i32 = arith.constant 0 : i32
    %1 = arith.cmpi eq, %c16_i32, %c0_i32 : i32
    %c1_i32 = arith.constant 1 : i32
    %2 = arith.select %1, %c1_i32, %c16_i32 : i32
    %3 = vector.broadcast %2 : i32 to vector<1x256xi32>
    %4 = arith.remsi %0, %3 : vector<1x256xi32>
    %c0_i32_0 = arith.constant 0 : i32
    %5 = vector.broadcast %c0_i32_0 : i32 to vector<1x256xi32>
    %6 = arith.cmpi ne, %4, %5 : vector<1x256xi32>
    %c0_i32_1 = arith.constant 0 : i32
    %7 = vector.broadcast %c0_i32_1 : i32 to vector<1x256xi32>
    %8 = arith.cmpi slt, %4, %7 : vector<1x256xi32>
    %c0_i32_2 = arith.constant 0 : i32
    %9 = arith.cmpi slt, %2, %c0_i32_2 : i32
    %10 = vector.broadcast %9 : i1 to vector<1x256xi1>
    %11 = vector.broadcast %10 : vector<1x256xi1> to vector<1x256xi1>
    %12 = arith.xori %8, %11 : vector<1x256xi1>
    %13 = arith.andi %12, %6 : vector<1x256xi1>
    %14 = vector.broadcast %2 : i32 to vector<1x256xi32>
    %15 = arith.addi %4, %14 : vector<1x256xi32>
    %16 = arith.select %13, %15, %4 : vector<1x256xi1>, vector<1x256xi32>
    %c16_i32_3 = arith.constant 16 : i32
    %17 = vector.broadcast %c16_i32_3 : i32 to vector<1x256xi32>
    %18 = arith.cmpi sge, %0, %17 : vector<1x256xi32>
    %c1_i32_4 = arith.constant 1 : i32
    %19 = vector.broadcast %c1_i32_4 : i32 to vector<1x256xi32>
    %20 = arith.cmpi sge, %16, %19 : vector<1x256xi32>
    %21 = arith.andi %18, %20 : vector<1x256xi1>
    %c16_i32_5 = arith.constant 16 : i32
    %22 = vector.broadcast %c16_i32_5 : i32 to vector<1x256xi32>
    %23 = arith.cmpi sge, %0, %22 : vector<1x256xi32>
    %c16_i32_6 = arith.constant 16 : i32
    %24 = vector.broadcast %c16_i32_6 : i32 to vector<1x256xi32>
    %25 = arith.cmpi sge, %0, %24 : vector<1x256xi32>
    %c15_i32 = arith.constant 15 : i32
    %26 = vector.broadcast %c15_i32 : i32 to vector<1x256xi32>
    %27 = arith.cmpi slt, %16, %26 : vector<1x256xi32>
    %28 = arith.andi %25, %27 : vector<1x256xi1>
    %c1_i32_7 = arith.constant 1 : i32
    %29 = vector.broadcast %c1_i32_7 : i32 to vector<1x256xi32>
    %30 = arith.cmpi sge, %16, %29 : vector<1x256xi32>
    %c15_i32_8 = arith.constant 15 : i32
    %31 = vector.broadcast %c15_i32_8 : i32 to vector<1x256xi32>
    %32 = arith.cmpi slt, %16, %31 : vector<1x256xi32>
    %c240_i32 = arith.constant 240 : i32
    %33 = vector.broadcast %c240_i32 : i32 to vector<1x256xi32>
    %34 = arith.cmpi slt, %0, %33 : vector<1x256xi32>
    %c1_i32_9 = arith.constant 1 : i32
    %35 = vector.broadcast %c1_i32_9 : i32 to vector<1x256xi32>
    %36 = arith.cmpi sge, %16, %35 : vector<1x256xi32>
    %37 = arith.andi %34, %36 : vector<1x256xi1>
    %c240_i32_10 = arith.constant 240 : i32
    %38 = vector.broadcast %c240_i32_10 : i32 to vector<1x256xi32>
    %39 = arith.cmpi slt, %0, %38 : vector<1x256xi32>
    %c240_i32_11 = arith.constant 240 : i32
    %40 = vector.broadcast %c240_i32_11 : i32 to vector<1x256xi32>
    %41 = arith.cmpi slt, %0, %40 : vector<1x256xi32>
    %c15_i32_12 = arith.constant 15 : i32
    %42 = vector.broadcast %c15_i32_12 : i32 to vector<1x256xi32>
    %43 = arith.cmpi slt, %16, %42 : vector<1x256xi32>
    %44 = arith.andi %41, %43 : vector<1x256xi1>
    %c0 = arith.constant 0 : index
    %c0_13 = arith.constant 0 : index
    %c0_14 = arith.constant 0 : index
    %45 = vector.load %arg2[%c0, %c0_13, %c0_14] : memref<1x4x256xf32, #tpu.memory_space<vmem>>, vector<1x4x256xf32>
    %46 = vector.shape_cast %45 : vector<1x4x256xf32> to vector<4x256xf32>
    %c64 = arith.constant 64 : index
    %c0_15 = arith.constant 0 : index
    %47 = vector.load %arg5[%c64, %c0_15] : memref<144x256xf32, #tpu.memory_space<vmem>>, vector<4x256xf32>
    tpu.vector_store %arg5[%c64, %c0_15], %46 {strides = array<i32>} : memref<144x256xf32, #tpu.memory_space<vmem>>, vector<4x256xf32>,
    %cst = arith.constant 0.000000e+00 : f32
    %48 = vector.broadcast %cst : f32 to vector<4x256xf32>
    %c68 = arith.constant 68 : index
    %c0_16 = arith.constant 0 : index
    %49 = vector.load %arg5[%c68, %c0_16] : memref<144x256xf32, #tpu.memory_space<vmem>>, vector<4x256xf32>
    tpu.vector_store %arg5[%c68, %c0_16], %48 {strides = array<i32>} : memref<144x256xf32, #tpu.memory_space<vmem>>, vector<4x256xf32>,
    %c0_17 = arith.constant 0 : index
    %c0_18 = arith.constant 0 : index
    %c0_19 = arith.constant 0 : index
    %50 = vector.load %arg3[%c0_17, %c0_18, %c0_19] : memref<1x8x256xf32, #tpu.memory_space<vmem>>, vector<1x8x256xf32>
    %51 = vector.shape_cast %50 : vector<1x8x256xf32> to vector<8x256xf32>
    %c72 = arith.constant 72 : index
    %c0_20 = arith.constant 0 : index
    %52 = vector.load %arg5[%c72, %c0_20] : memref<144x256xf32, #tpu.memory_space<vmem>>, vector<8x256xf32>
    tpu.vector_store %arg5[%c72, %c0_20], %51 {strides = array<i32>} : memref<144x256xf32, #tpu.memory_space<vmem>>, vector<8x256xf32>,
    %c64_21 = arith.constant 64 : index
    %c0_22 = arith.constant 0 : index
    %53 = vector.load %arg5[%c64_21, %c0_22] : memref<144x256xf32, #tpu.memory_space<vmem>>, vector<16x256xf32>
    %c17_i32 = arith.constant 17 : i32
    %54 = tpu.dynamic_rotate %53 by %c17_i32 dim 1 : vector<16x256xf32>, i32 -> vector<16x256xf32>
    %c0_i32_23 = arith.constant 0 : i32
    %55 = arith.sitofp %c0_i32_23 : i32 to f32
    %56 = vector.shape_cast %21 : vector<1x256xi1> to vector<1x256xi1>
    %57 = vector.broadcast %56 : vector<1x256xi1> to vector<16x256xi1>
    %58 = vector.broadcast %55 : f32 to vector<16x256xf32>
    %59 = arith.select %57, %54, %58 : vector<16x256xi1>, vector<16x256xf32>
    %c0_24 = arith.constant 0 : index
    %c0_25 = arith.constant 0 : index
    %60 = vector.load %arg5[%c0_24, %c0_25] : memref<144x256xf32, #tpu.memory_space<vmem>>, vector<16x256xf32>
    tpu.vector_store %arg5[%c0_24, %c0_25], %59 {strides = array<i32>} : memref<144x256xf32, #tpu.memory_space<vmem>>, vector<16x256xf32>,
    %c16_i32_26 = arith.constant 16 : i32
    %61 = tpu.dynamic_rotate %53 by %c16_i32_26 dim 1 : vector<16x256xf32>, i32 -> vector<16x256xf32>
    %c0_i32_27 = arith.constant 0 : i32
    %62 = arith.sitofp %c0_i32_27 : i32 to f32
    %63 = vector.shape_cast %23 : vector<1x256xi1> to vector<1x256xi1>
    %64 = vector.broadcast %63 : vector<1x256xi1> to vector<16x256xi1>
    %65 = vector.broadcast %62 : f32 to vector<16x256xf32>
    %66 = arith.select %64, %61, %65 : vector<16x256xi1>, vector<16x256xf32>
    %c16 = arith.constant 16 : index
    %c0_28 = arith.constant 0 : index
    %67 = vector.load %arg5[%c16, %c0_28] : memref<144x256xf32, #tpu.memory_space<vmem>>, vector<16x256xf32>
    tpu.vector_store %arg5[%c16, %c0_28], %66 {strides = array<i32>} : memref<144x256xf32, #tpu.memory_space<vmem>>, vector<16x256xf32>,
    %c15_i32_29 = arith.constant 15 : i32
    %68 = tpu.dynamic_rotate %53 by %c15_i32_29 dim 1 : vector<16x256xf32>, i32 -> vector<16x256xf32>
    %c0_i32_30 = arith.constant 0 : i32
    %69 = arith.sitofp %c0_i32_30 : i32 to f32
    %70 = vector.shape_cast %28 : vector<1x256xi1> to vector<1x256xi1>
    %71 = vector.broadcast %70 : vector<1x256xi1> to vector<16x256xi1>
    %72 = vector.broadcast %69 : f32 to vector<16x256xf32>
    %73 = arith.select %71, %68, %72 : vector<16x256xi1>, vector<16x256xf32>
    %c32 = arith.constant 32 : index
    %c0_31 = arith.constant 0 : index
    %74 = vector.load %arg5[%c32, %c0_31] : memref<144x256xf32, #tpu.memory_space<vmem>>, vector<16x256xf32>
    tpu.vector_store %arg5[%c32, %c0_31], %73 {strides = array<i32>} : memref<144x256xf32, #tpu.memory_space<vmem>>, vector<16x256xf32>,
    %c1_i32_32 = arith.constant 1 : i32
    %75 = tpu.dynamic_rotate %53 by %c1_i32_32 dim 1 : vector<16x256xf32>, i32 -> vector<16x256xf32>
    %c0_i32_33 = arith.constant 0 : i32
    %76 = arith.sitofp %c0_i32_33 : i32 to f32
    %77 = vector.shape_cast %30 : vector<1x256xi1> to vector<1x256xi1>
    %78 = vector.broadcast %77 : vector<1x256xi1> to vector<16x256xi1>
    %79 = vector.broadcast %76 : f32 to vector<16x256xf32>
    %80 = arith.select %78, %75, %79 : vector<16x256xi1>, vector<16x256xf32>
    %c48 = arith.constant 48 : index
    %c0_34 = arith.constant 0 : index
    %81 = vector.load %arg5[%c48, %c0_34] : memref<144x256xf32, #tpu.memory_space<vmem>>, vector<16x256xf32>
    tpu.vector_store %arg5[%c48, %c0_34], %80 {strides = array<i32>} : memref<144x256xf32, #tpu.memory_space<vmem>>, vector<16x256xf32>,
    %c255_i32 = arith.constant 255 : i32
    %82 = tpu.dynamic_rotate %53 by %c255_i32 dim 1 : vector<16x256xf32>, i32 -> vector<16x256xf32>
    %c0_i32_35 = arith.constant 0 : i32
    %83 = arith.sitofp %c0_i32_35 : i32 to f32
    %84 = vector.shape_cast %32 : vector<1x256xi1> to vector<1x256xi1>
    %85 = vector.broadcast %84 : vector<1x256xi1> to vector<16x256xi1>
    %86 = vector.broadcast %83 : f32 to vector<16x256xf32>
    %87 = arith.select %85, %82, %86 : vector<16x256xi1>, vector<16x256xf32>
    %c80 = arith.constant 80 : index
    %c0_36 = arith.constant 0 : index
    %88 = vector.load %arg5[%c80, %c0_36] : memref<144x256xf32, #tpu.memory_space<vmem>>, vector<16x256xf32>
    tpu.vector_store %arg5[%c80, %c0_36], %87 {strides = array<i32>} : memref<144x256xf32, #tpu.memory_space<vmem>>, vector<16x256xf32>,
    %c241_i32 = arith.constant 241 : i32
    %89 = tpu.dynamic_rotate %53 by %c241_i32 dim 1 : vector<16x256xf32>, i32 -> vector<16x256xf32>
    %c0_i32_37 = arith.constant 0 : i32
    %90 = arith.sitofp %c0_i32_37 : i32 to f32
    %91 = vector.shape_cast %37 : vector<1x256xi1> to vector<1x256xi1>
    %92 = vector.broadcast %91 : vector<1x256xi1> to vector<16x256xi1>
    %93 = vector.broadcast %90 : f32 to vector<16x256xf32>
    %94 = arith.select %92, %89, %93 : vector<16x256xi1>, vector<16x256xf32>
    %c96 = arith.constant 96 : index
    %c0_38 = arith.constant 0 : index
    %95 = vector.load %arg5[%c96, %c0_38] : memref<144x256xf32, #tpu.memory_space<vmem>>, vector<16x256xf32>
    tpu.vector_store %arg5[%c96, %c0_38], %94 {strides = array<i32>} : memref<144x256xf32, #tpu.memory_space<vmem>>, vector<16x256xf32>,
    %c240_i32_39 = arith.constant 240 : i32
    %96 = tpu.dynamic_rotate %53 by %c240_i32_39 dim 1 : vector<16x256xf32>, i32 -> vector<16x256xf32>
    %c0_i32_40 = arith.constant 0 : i32
    %97 = arith.sitofp %c0_i32_40 : i32 to f32
    %98 = vector.shape_cast %39 : vector<1x256xi1> to vector<1x256xi1>
    %99 = vector.broadcast %98 : vector<1x256xi1> to vector<16x256xi1>
    %100 = vector.broadcast %97 : f32 to vector<16x256xf32>
    %101 = arith.select %99, %96, %100 : vector<16x256xi1>, vector<16x256xf32>
    %c112 = arith.constant 112 : index
    %c0_41 = arith.constant 0 : index
    %102 = vector.load %arg5[%c112, %c0_41] : memref<144x256xf32, #tpu.memory_space<vmem>>, vector<16x256xf32>
    tpu.vector_store %arg5[%c112, %c0_41], %101 {strides = array<i32>} : memref<144x256xf32, #tpu.memory_space<vmem>>, vector<16x256xf32>,
    %c239_i32 = arith.constant 239 : i32
    %103 = tpu.dynamic_rotate %53 by %c239_i32 dim 1 : vector<16x256xf32>, i32 -> vector<16x256xf32>
    %c0_i32_42 = arith.constant 0 : i32
    %104 = arith.sitofp %c0_i32_42 : i32 to f32
    %105 = vector.shape_cast %44 : vector<1x256xi1> to vector<1x256xi1>
    %106 = vector.broadcast %105 : vector<1x256xi1> to vector<16x256xi1>
    %107 = vector.broadcast %104 : f32 to vector<16x256xf32>
    %108 = arith.select %106, %103, %107 : vector<16x256xi1>, vector<16x256xf32>
    %c128 = arith.constant 128 : index
    %c0_43 = arith.constant 0 : index
    %109 = vector.load %arg5[%c128, %c0_43] : memref<144x256xf32, #tpu.memory_space<vmem>>, vector<16x256xf32>
    tpu.vector_store %arg5[%c128, %c0_43], %108 {strides = array<i32>} : memref<144x256xf32, #tpu.memory_space<vmem>>, vector<16x256xf32>,
    %cst_44 = arith.constant 1.000000e+00 : f32
    %110 = vector.broadcast %cst_44 : f32 to vector<1x256xf32>
    %c4 = arith.constant 4 : index
    %c0_45 = arith.constant 0 : index
    %111 = vector.load %arg5[%c4, %c0_45] : memref<144x256xf32, #tpu.memory_space<vmem>>, vector<1x256xf32>
    tpu.vector_store %arg5[%c4, %c0_45], %110 {strides = array<i32>} : memref<144x256xf32, #tpu.memory_space<vmem>>, vector<1x256xf32>,
    %c0_46 = arith.constant 0 : index
    %c0_47 = arith.constant 0 : index
    %112 = vector.load %arg1[%c0_46, %c0_47] : memref<8x144xf32, #tpu.memory_space<vmem>>, vector<8x144xf32>
    %c0_48 = arith.constant 0 : index
    %c0_49 = arith.constant 0 : index
    %113 = vector.load %arg5[%c0_48, %c0_49] : memref<144x256xf32, #tpu.memory_space<vmem>>, vector<144x256xf32>
    %cst_50 = arith.constant dense<0.000000e+00> : vector<8x256xf32>
    %114 = tpu.matmul %112, %113, %cst_50 {dimension_numbers = #tpu.dot_dimension_numbers<[1], [0], [0], [1], [0, 0, 1, 1], [], []>} : vector<8x144xf32>, vector<144x256xf32>, vector<8x256xf32> -> vector<8x256xf32>
    %115 = math.tanh %114 : vector<8x256xf32>
    %c0_51 = arith.constant 0 : index
    %c0_52 = arith.constant 0 : index
    %c0_53 = arith.constant 0 : index
    %116 = vector.load %arg4[%c0_51, %c0_52, %c0_53] : memref<1x8x256xf32, #tpu.memory_space<vmem>>, vector<1x8x256xf32>
    %117 = vector.shape_cast %116 : vector<1x8x256xf32> to vector<8x256xf32>
    %118 = vector.shape_cast %115 : vector<8x256xf32> to vector<1x8x256xf32>
    tpu.vector_store %arg4[%c0_51, %c0_52, %c0_53], %118 {strides = array<i32>} : memref<1x8x256xf32, #tpu.memory_space<vmem>>, vector<1x8x256xf32>,
    return
  }
  func.func @transform_0(%arg0: i32) -> (i32, i32) {
    %c0_i32 = arith.constant 0 : i32
    %c0_i32_0 = arith.constant 0 : i32
    %c0_i32_1 = arith.constant 0 : i32
    return %c0_i32, %c0_i32_0 : i32, i32
  }
  func.func @transform_1(%arg0: i32) -> (i32, i32, i32) {
    %c0_i32 = arith.constant 0 : i32
    %c0_i32_0 = arith.constant 0 : i32
    %c0_i32_1 = arith.constant 0 : i32
    return %arg0, %c0_i32, %c0_i32_0 : i32, i32, i32
  }
  func.func @transform_2(%arg0: i32) -> (i32, i32, i32) {
    %c0_i32 = arith.constant 0 : i32
    %c0_i32_0 = arith.constant 0 : i32
    %c0_i32_1 = arith.constant 0 : i32
    return %arg0, %c0_i32, %c0_i32_0 : i32, i32, i32
  }
  func.func @transform_3(%arg0: i32) -> (i32, i32, i32) {
    %c0_i32 = arith.constant 0 : i32
    %c0_i32_0 = arith.constant 0 : i32
    %c0_i32_1 = arith.constant 0 : i32
    return %arg0, %c0_i32, %c0_i32_0 : i32, i32, i32
  }
}

</mosaic_0001>

<llo_original>
// kernel: tpu_custom_call.1
$region0: #{tpu_custom_call.1}
  #allocation0 [shape = 'u32[]', space=smem, size = 0x4, offset = 0x4, fixed_abs, tag = 'smem constant byte address 0x4 - core index']
  #allocation1 [shape = 'u32[144,128]{1,0:T(1,128)}', space=vmem, size = 0x12000, scoped, tag = 'internal scratch']
  #allocation2 [shape = 'f32[144,256]{1,0:T(8,128)}', space=vmem, size = 0x24000, scoped, tag = 'scratch operand']
  %s0 = inlined_call_operand.hbm [shape: f32[8,144], index: 0, kind: input, shape index: {}]
  %s1 = inlined_call_operand.hbm [shape: f32[2,4,256], index: 1, kind: input, shape index: {}]
  %s2 = inlined_call_operand.hbm [shape: f32[2,8,256], index: 2, kind: input, shape index: {}]
  %s3 = inlined_call_operand.hbm [shape: f32[2,8,256], index: 3, kind: output, shape index: {}]
  %s4 = sld [smem:[#allocation0]]
  $region57: #{tpu_custom_call.1} parent=0
    _
  %s6 = ssub.s32 1, %s4
  %s7 = scalar_select 0, %s6, %s4
  $region1: #{tpu_custom_call.1} parent=0
    #allocation3 [shape = 'u8[8192]{0}', space=vmem, size = 0x2000, scoped, tag = 'input window, operand 0, single buffered']
    #allocation4 [shape = 's32[2]{0}', space=sflag, size = 0x8, scoped, tag = 'scoped memory for tpu_custom_call.1']
    #allocation5 [shape = 's32[2]{0}', space=sflag, size = 0x8, scoped, tag = 'scoped memory for tpu_custom_call.1']
    #allocation6 [shape = 'u8[8192]{0}', space=vmem, size = 0x2000, scoped, tag = 'input window, operand 1']
    #allocation7 [shape = 's32[2]{0}', space=sflag, size = 0x8, scoped, tag = 'scoped memory for tpu_custom_call.1']
    #allocation8 [shape = 'u8[16384]{0}', space=vmem, size = 0x4000, scoped, tag = 'input window, operand 2']
    #allocation9 [shape = 'u8[16384]{0}', space=vmem, size = 0x4000, scoped, tag = 'output window, operand 0']
    %8 = vsyncpa [#allocation4], 0
    %9 = vsyncpa [#allocation7], 0
    %s10 = scalar_lea.sflag [#allocation7], 1
    %11 = vsyncpa %s10, 0
    %12 = vsyncpa [#allocation5], 0
    %s13 = scalar_lea.sflag [#allocation5], 1
    %14 = vsyncpa %s13, 0
    loop: start=0, step=1, limit=4
    $region2: #{tpu_custom_call.1} parent=1 // loop_pre_header
      _
    $region3: #{tpu_custom_call.1} parent=1 // loop_header
      %s16 = sphi 0, %s20
      %p17 = scmp.ge.s32.totalorder %s16, 4
      %s24 = sphi 0, %s24
      %s26 = sphi 0, %s24
      %s27 = sphi 0, %s26
      %s41 = sphi 0, %s27
      %s47 = sphi 0, %s49
      %s50 = sphi 0, %s47
      %s51 = sphi 0, %s50
      %s67 = sphi 0, %s51
      %s73 = sphi 0, %s75
      %s76 = sphi 0, %s73
      %s77 = sphi 0, %s76
      %s93 = sphi 0, %s77
      %s99 = sphi 0, %s101
      %s102 = sphi 0, %s99
      %s103 = sphi 0, %s102
      %s119 = sphi 0, %s103
    $region4: #{tpu_custom_call.1} parent=1 // loop_header_branch
      %19 = sbr.rel (%p17) target = $region8
    $region5: #{tpu_custom_call.1} parent=1 // loop_body
      %s21 = ssub.s32 %s16, 1
      %s22 = ssub.s32 %s16, 2
      %s23 = sadd.s32 %s16, 1
      %s25 = sadd.s32 %s24, 1
      %p28 = scmp.eq.s32.totalorder %s16, 1
      %p29 = scmp.ne.s32.totalorder %s24, %s26
      %p30 = scmp.eq.s32.totalorder %s16, 0
      %p31 = por %p29, %p30
      %p32 = scmp.ne.s32.totalorder %s24, %s26
      %p33 = scmp.eq.s32.totalorder %s21, 1
      %p34 = por %p32, %p33
      %p35 = scmp.ne.s32.totalorder %s26, %s27
      %p36 = scmp.eq.s32.totalorder %s21, 0
      %p37 = por %p35, %p36
      %p38 = scmp.ne.s32.totalorder %s26, %s27
      %p39 = scmp.eq.s32.totalorder %s22, 1
      %p40 = por %p38, %p39
      %p42 = scmp.ne.s32.totalorder %s27, %s41
      %p43 = scmp.eq.s32.totalorder %s22, 0
      %p44 = por %p42, %p43
      %s45 = ssub.s32 %s16, %s23
      %p46 = scmp.eq.s32.totalorder %s45, 0
      %s48 = sadd.s32 %s47, 1
      %s49 = scalar_select %p46, %s47, %s48
      %p52 = pneg %p46
      %p53 = scmp.eq.s32.totalorder %s16, 1
      %p54 = por %p52, %p53
      %p55 = scmp.ne.s32.totalorder %s47, %s50
      %p56 = scmp.eq.s32.totalorder %s16, 0
      %p57 = por %p55, %p56
      %p58 = scmp.ne.s32.totalorder %s47, %s50
      %p59 = scmp.eq.s32.totalorder %s21, 1
      %p60 = por %p58, %p59
      %p61 = scmp.ne.s32.totalorder %s50, %s51
      %p62 = scmp.eq.s32.totalorder %s21, 0
      %p63 = por %p61, %p62
      %p64 = scmp.ne.s32.totalorder %s50, %s51
      %p65 = scmp.eq.s32.totalorder %s22, 1
      %p66 = por %p64, %p65
      %p68 = scmp.ne.s32.totalorder %s51, %s67
      %p69 = scmp.eq.s32.totalorder %s22, 0
      %p70 = por %p68, %p69
      %s71 = ssub.s32 %s16, %s23
      %p72 = scmp.eq.s32.totalorder %s71, 0
      %s74 = sadd.s32 %s73, 1
      %s75 = scalar_select %p72, %s73, %s74
      %p78 = pneg %p72
      %p79 = scmp.eq.s32.totalorder %s16, 1
      %p80 = por %p78, %p79
      %p81 = scmp.ne.s32.totalorder %s73, %s76
      %p82 = scmp.eq.s32.totalorder %s16, 0
      %p83 = por %p81, %p82
      %p84 = scmp.ne.s32.totalorder %s73, %s76
      %p85 = scmp.eq.s32.totalorder %s21, 1
      %p86 = por %p84, %p85
      %p87 = scmp.ne.s32.totalorder %s76, %s77
      %p88 = scmp.eq.s32.totalorder %s21, 0
      %p89 = por %p87, %p88
      %p90 = scmp.ne.s32.totalorder %s76, %s77
      %p91 = scmp.eq.s32.totalorder %s22, 1
      %p92 = por %p90, %p91
      %p94 = scmp.ne.s32.totalorder %s77, %s93
      %p95 = scmp.eq.s32.totalorder %s22, 0
      %p96 = por %p94, %p95
      %s97 = ssub.s32 %s16, %s23
      %p98 = scmp.eq.s32.totalorder %s97, 0
      %s100 = sadd.s32 %s99, 1
      %s101 = scalar_select %p98, %s99, %s100
      %p104 = pneg %p98
      %p105 = scmp.eq.s32.totalorder %s16, 1
      %p106 = por %p104, %p105
      %p107 = scmp.ne.s32.totalorder %s99, %s102
      %p108 = scmp.eq.s32.totalorder %s16, 0
      %p109 = por %p107, %p108
      %p110 = scmp.ne.s32.totalorder %s99, %s102
      %p111 = scmp.eq.s32.totalorder %s21, 1
      %p112 = por %p110, %p111
      %p113 = scmp.ne.s32.totalorder %s102, %s103
      %p114 = scmp.eq.s32.totalorder %s21, 0
      %p115 = por %p113, %p114
      %p116 = scmp.ne.s32.totalorder %s102, %s103
      %p117 = scmp.eq.s32.totalorder %s22, 1
      %p118 = por %p116, %p117
      %p120 = scmp.ne.s32.totalorder %s103, %s119
      %p121 = scmp.eq.s32.totalorder %s22, 0
      %p122 = por %p120, %p121
      %p123 = scmp.le.s32.totalorder 1, %s16
      %p124 = scmp.lt.s32.totalorder %s16, 3
      %p125 = pnand %p123, %p124
      %p126 = pneg %p125
      // Predicated region
      $region9: #{tpu_custom_call.1} parent=5 // pred_check
        _
      $region10: #{tpu_custom_call.1} parent=5 // pred_check_branch
        %128 = sbr.rel (%p125) target = $region12
      $region11: #{tpu_custom_call.1} parent=5 // pred_region
        %s129 = ssub.s32 %s16, 1
        // Predicated region
        $region13: #{tpu_custom_call.1} parent=11 // pred_check
          %p130 = pneg %p37
        $region14: #{tpu_custom_call.1} parent=11 // pred_check_branch
          %132 = sbr.rel (%p130) target = $region16
        $region15: #{tpu_custom_call.1} parent=11 // pred_region
          %s134 = ssub.s32 256, 256
          %135 = vsyncadd [#allocation4], %s134
          %s137 = sshll.u32 [#allocation3], 4
          %s138 = int_to_ptr.vmem [resolvable:$true] %s137
          %140 = dma.hbm_to_vmem [thread:$0]  %s0, 256, %s138, [#allocation4]
        $region16: #{tpu_custom_call.1} parent=11 // pred_fallthru
          _
      $region12: #{tpu_custom_call.1} parent=5 // pred_fallthru
        _
      %p141 = scmp.lt.s32.totalorder %s16, 2
      // Predicated region
      $region17: #{tpu_custom_call.1} parent=5 // pred_check
        %p142 = pneg %p141
      $region18: #{tpu_custom_call.1} parent=5 // pred_check_branch
        %144 = sbr.rel (%p142) target = $region20
      $region19: #{tpu_custom_call.1} parent=5 // pred_region
        // Predicated region
        $region21: #{tpu_custom_call.1} parent=19 // pred_check
          %p145 = pneg %p57
        $region22: #{tpu_custom_call.1} parent=19 // pred_check_branch
          %147 = sbr.rel (%p145) target = $region24
        $region23: #{tpu_custom_call.1} parent=19 // pred_region
          %s148 = sand.u32 %s16, 1
          %s149 = scalar_lea.sflag [#allocation7], %s148
          %s150 = sand.u32 %s47, 1
          %s151 = smul.addr %s150, 8
          %s152 = scalar_lea.vmem [#allocation6], %s151
          %s154 = ssub.s32 128, 128
          %155 = vsyncadd %s149, %s154
          %s156 = smul.addr %s16, 2
          %s157 = smul.addr %s156, 64
          %s158 = scalar_lea.hbm %s1, %s157
          %s160 = sshll.u32 %s152, 4
          %s161 = int_to_ptr.vmem [resolvable:$true] %s160
          %163 = dma.hbm_to_vmem [thread:$0]  %s158, 128, %s161, %s149
        $region24: #{tpu_custom_call.1} parent=19 // pred_fallthru
          _
        // Predicated region
        $region25: #{tpu_custom_call.1} parent=19 // pred_check
          %p164 = pneg %p83
        $region26: #{tpu_custom_call.1} parent=19 // pred_check_branch
          %166 = sbr.rel (%p164) target = $region28
        $region27: #{tpu_custom_call.1} parent=19 // pred_region
          %s167 = sand.u32 %s16, 1
          %s168 = scalar_lea.sflag [#allocation7], %s167
          %s169 = sand.u32 %s73, 1
          %s170 = smul.addr %s169, 16
          %s171 = scalar_lea.vmem [#allocation8], %s170
          %s173 = ssub.s32 256, 256
          %174 = vsyncadd %s168, %s173
          %s175 = smul.addr %s16, 2
          %s176 = smul.addr %s175, 128
          %s177 = scalar_lea.hbm %s2, %s176
          %s179 = sshll.u32 %s171, 4
          %s180 = int_to_ptr.vmem [resolvable:$true] %s179
          %182 = dma.hbm_to_vmem [thread:$0]  %s177, 256, %s180, %s168
        $region28: #{tpu_custom_call.1} parent=19 // pred_fallthru
          _
      $region20: #{tpu_custom_call.1} parent=5 // pred_fallthru
        _
      %p183 = scmp.le.s32.totalorder 1, %s16
      %p184 = scmp.lt.s32.totalorder %s16, 3
      %p185 = pnand %p183, %p184
      %p186 = pneg %p185
      // Predicated region
      $region29: #{tpu_custom_call.1} parent=5 // pred_check
        _
      $region30: #{tpu_custom_call.1} parent=5 // pred_check_branch
        %188 = sbr.rel (%p185) target = $region32
      $region31: #{tpu_custom_call.1} parent=5 // pred_region
        %s189 = ssub.s32 %s16, 1
        // Predicated region
        $region33: #{tpu_custom_call.1} parent=31 // pred_check
          %p190 = pneg %p37
        $region34: #{tpu_custom_call.1} parent=31 // pred_check_branch
          %192 = sbr.rel (%p190) target = $region36
        $region35: #{tpu_custom_call.1} parent=31 // pred_region
          %193 = dma.done [#allocation4], 256
        $region36: #{tpu_custom_call.1} parent=31 // pred_fallthru
          _
        %s194 = sand.u32 %s21, 1
        %s195 = scalar_lea.sflag [#allocation7], %s194
        %s196 = sand.u32 %s50, 1
        %s197 = smul.addr %s196, 8
        %s198 = scalar_lea.vmem [#allocation6], %s197
        // Predicated region
        $region37: #{tpu_custom_call.1} parent=31 // pred_check
          %p199 = pneg %p63
        $region38: #{tpu_custom_call.1} parent=31 // pred_check_branch
          %201 = sbr.rel (%p199) target = $region40
        $region39: #{tpu_custom_call.1} parent=31 // pred_region
          %202 = dma.done %s195, 128
        $region40: #{tpu_custom_call.1} parent=31 // pred_fallthru
          _
        %s203 = sand.u32 %s21, 1
        %s204 = scalar_lea.sflag [#allocation7], %s203
        %s205 = sand.u32 %s76, 1
        %s206 = smul.addr %s205, 16
        %s207 = scalar_lea.vmem [#allocation8], %s206
        // Predicated region
        $region41: #{tpu_custom_call.1} parent=31 // pred_check
          %p208 = pneg %p89
        $region42: #{tpu_custom_call.1} parent=31 // pred_check_branch
          %210 = sbr.rel (%p208) target = $region44
        $region43: #{tpu_custom_call.1} parent=31 // pred_region
          %211 = dma.done %s204, 256
        $region44: #{tpu_custom_call.1} parent=31 // pred_fallthru
          _
        %p212 = pneg %p37
        %p213 = pneg %p34
        %s214 = sand.u32 %s21, 1
        %s215 = scalar_lea.sflag [#allocation7], %s214
        %s216 = sand.u32 %s50, 1
        %s217 = smul.addr %s216, 8
        %s218 = scalar_lea.vmem [#allocation6], %s217
        %p219 = pneg %p63
        %p220 = pneg %p60
        %s221 = sand.u32 %s21, 1
        %s222 = scalar_lea.sflag [#allocation7], %s221
        %s223 = sand.u32 %s76, 1
        %s224 = smul.addr %s223, 16
        %s225 = scalar_lea.vmem [#allocation8], %s224
        %p226 = pneg %p89
        %p227 = pneg %p86
        %p228 = pneg %p115
        %p229 = pneg %p112
        %s230 = sand.u32 %s102, 1
        %s231 = scalar_lea.sflag [#allocation5], %s230
        %s232 = sand.u32 %s102, 1
        %s233 = smul.addr %s232, 16
        %s234 = scalar_lea.vmem [#allocation9], %s233
        %v235 = vlaneseq
        %v236 = vand.u32 %v235, 127
        %v237 = vadd.s32 %v236, 128
        %vm238 = vcmp.lt.s32.totalorder %v236, 0
        %v239 = vsub.s32 0, %v236
        %v240 = vsel %vm238, %v239, %v236
        %v241 = vshrl.u32 %v240, 4
        %v242 = vand.u32 %v240, 15
        %v243 = vsub.s32 0, %v242
        %v244 = vsel %vm238, %v243, %v242
        %vm245 = vcmp.lt.s32.totalorder %v237, 0
        %v246 = vsub.s32 0, %v237
        %v247 = vsel %vm245, %v246, %v237
        %v248 = vshrl.u32 %v247, 4
        %v249 = vand.u32 %v247, 15
        %v250 = vsub.s32 0, %v249
        %v251 = vsel %vm245, %v250, %v249
        %vm252 = vcmp.ne.s32.totalorder %v244, 0
        %vm253 = vcmp.ne.s32.totalorder %v251, 0
        %vm254 = vcmp.lt.s32.totalorder %v244, 0
        %vm255 = vcmp.lt.s32.totalorder %v251, 0
        %vm256 = vmand %vm254, %vm252
        %vm257 = vmand %vm255, %vm253
        %v258 = vadd.s32 %v244, 16
        %v259 = vadd.s32 %v251, 16
        %v260 = vsel %vm256, %v258, %v244
        %v261 = vsel %vm257, %v259, %v251
        %vm262 = vcmp.ge.s32.totalorder %v236, 16
        %vm263 = vcmp.ge.s32.totalorder %v237, 16
        %vm264 = vcmp.ge.s32.totalorder %v260, 1
        %vm265 = vcmp.ge.s32.totalorder %v261, 1
        %vm266 = vmand %vm262, %vm264
        %vm267 = vmand %vm263, %vm265
        %vm268 = vcmp.lt.s32.totalorder %v260, 15
        %vm269 = vcmp.lt.s32.totalorder %v261, 15
        %vm270 = vmand %vm262, %vm268
        %vm271 = vmand %vm263, %vm269
        %vm272 = vcmp.lt.s32.totalorder %v236, 240
        %vm273 = vcmp.lt.s32.totalorder %v237, 240
        %vm274 = vmand %vm272, %vm264
        %vm275 = vmand %vm273, %vm265
        %vm276 = vmand %vm272, %vm268
        %vm277 = vmand %vm273, %vm269
        %v278 = vld [vmem:[%s198] sm:$0xff]
        %v280 = vcombine.high %v278, %v278
        %282 = vst [vmem:[#allocation2 + $0x80] sm:$0xf] %v278
        %283 = vst [vmem:[#allocation2 + $0x88] sm:$0xf] %v280
        %284 = vst [vmem:[#allocation2 + $0x80] sm:$0xf0] 0.0
        %285 = vst [vmem:[#allocation2 + $0x88] sm:$0xf0] 0.0
        %v286 = vld [vmem:[%s207] sm:$0xff]
        %v287 = vld [vmem:[%s207 + $0x8] sm:$0xff]
        %288 = vst [vmem:[#allocation2 + $0x90] sm:$0xff] %v286
        %289 = vst [vmem:[#allocation2 + $0x98] sm:$0xff] %v287
        %v290 = vld [vmem:[#allocation2 + $0x80] sm:$0xff]
        %v291 = vld [vmem:[#allocation2 + $0x88] sm:$0xff]
        %v292 = vld [vmem:[#allocation2 + $0x90] sm:$0xff]
        %v293 = vld [vmem:[#allocation2 + $0x98] sm:$0xff]
        %294 = vrot.lane.b32.xlu0 %v290, 17
        %v295 = vpop.permute.xlu0 %294
        %296 = vrot.lane.b32.xlu0 %v292, 17
        %v297 = vpop.permute.xlu0 %296
        %298 = vrot.lane.b32.xlu0 %v291, 17
        %v299 = vpop.permute.xlu0 %298
        %300 = vrot.lane.b32.xlu0 %v293, 17
        %v301 = vpop.permute.xlu0 %300
        %vm302 = vcmp.lt.s32.totalorder %v236, 17
        %v303 = vsel %vm302, %v295, %v299
        %v304 = vsel %vm302, %v297, %v301
        %v305 = vsel %vm302, %v299, %v295
        %v306 = vsel %vm302, %v301, %v297
        %v307 = vsel %vm266, 1, 0
        %v308 = vsel %vm267, 1, 0
        %vm309 = vcmp.eq.s32.totalorder %v307, 1
        %vm310 = vcmp.eq.s32.totalorder %v308, 1
        %v311 = vsel %vm309, %v305, 0.0
        %v312 = vsel %vm310, %v303, 0.0
        %v313 = vsel %vm309, %v306, 0.0
        %v314 = vsel %vm310, %v304, 0.0
        %315 = vst [vmem:[#allocation2] sm:$0xff] %v311
        %316 = vst [vmem:[#allocation2 + $0x8] sm:$0xff] %v312
        %317 = vst [vmem:[#allocation2 + $0x10] sm:$0xff] %v313
        %318 = vst [vmem:[#allocation2 + $0x18] sm:$0xff] %v314
        %319 = vrot.lane.b32.xlu0 %v290, 16
        %v320 = vpop.permute.xlu0 %319
        %321 = vrot.lane.b32.xlu0 %v292, 16
        %v322 = vpop.permute.xlu0 %321
        %323 = vrot.lane.b32.xlu0 %v291, 16
        %v324 = vpop.permute.xlu0 %323
        %325 = vrot.lane.b32.xlu0 %v293, 16
        %v326 = vpop.permute.xlu0 %325
        %vm327 = vcmp.lt.s32.totalorder %v236, 16
        %v328 = vsel %vm327, %v320, %v324
        %v329 = vsel %vm327, %v322, %v326
        %v330 = vsel %vm327, %v324, %v320
        %v331 = vsel %vm327, %v326, %v322
        %v332 = vsel %vm262, 1, 0
        %v333 = vsel %vm263, 1, 0
        %vm334 = vcmp.eq.s32.totalorder %v332, 1
        %vm335 = vcmp.eq.s32.totalorder %v333, 1
        %v336 = vsel %vm334, %v330, 0.0
        %v337 = vsel %vm335, %v328, 0.0
        %v338 = vsel %vm334, %v331, 0.0
        %v339 = vsel %vm335, %v329, 0.0
        %340 = vst [vmem:[#allocation2 + $0x20] sm:$0xff] %v336
        %341 = vst [vmem:[#allocation2 + $0x28] sm:$0xff] %v337
        %342 = vst [vmem:[#allocation2 + $0x30] sm:$0xff] %v338
        %343 = vst [vmem:[#allocation2 + $0x38] sm:$0xff] %v339
        %344 = vrot.lane.b32.xlu0 %v290, 15
        %v345 = vpop.permute.xlu0 %344
        %346 = vrot.lane.b32.xlu0 %v292, 15
        %v347 = vpop.permute.xlu0 %346
        %348 = vrot.lane.b32.xlu0 %v291, 15
        %v349 = vpop.permute.xlu0 %348
        %350 = vrot.lane.b32.xlu0 %v293, 15
        %v351 = vpop.permute.xlu0 %350
        %vm352 = vcmp.lt.s32.totalorder %v236, 15
        %v353 = vsel %vm352, %v345, %v349
        %v354 = vsel %vm352, %v347, %v351
        %v355 = vsel %vm352, %v349, %v345
        %v356 = vsel %vm352, %v351, %v347
        %v357 = vsel %vm270, 1, 0
        %v358 = vsel %vm271, 1, 0
        %vm359 = vcmp.eq.s32.totalorder %v357, 1
        %vm360 = vcmp.eq.s32.totalorder %v358, 1
        %v361 = vsel %vm359, %v355, 0.0
        %v362 = vsel %vm360, %v353, 0.0
        %v363 = vsel %vm359, %v356, 0.0
        %v364 = vsel %vm360, %v354, 0.0
        %365 = vst [vmem:[#allocation2 + $0x40] sm:$0xff] %v361
        %366 = vst [vmem:[#allocation2 + $0x48] sm:$0xff] %v362
        %367 = vst [vmem:[#allocation2 + $0x50] sm:$0xff] %v363
        %368 = vst [vmem:[#allocation2 + $0x58] sm:$0xff] %v364
        %369 = vrot.lane.b32.xlu0 %v290, 1
        %v370 = vpop.permute.xlu0 %369
        %371 = vrot.lane.b32.xlu0 %v292, 1
        %v372 = vpop.permute.xlu0 %371
        %373 = vrot.lane.b32.xlu0 %v291, 1
        %v374 = vpop.permute.xlu0 %373
        %375 = vrot.lane.b32.xlu0 %v293, 1
        %v376 = vpop.permute.xlu0 %375
        %vm377 = vcmp.lt.s32.totalorder %v236, 1
        %v378 = vsel %vm377, %v370, %v374
        %v379 = vsel %vm377, %v372, %v376
        %v380 = vsel %vm377, %v374, %v370
        %v381 = vsel %vm377, %v376, %v372
        %v382 = vsel %vm264, 1, 0
        %v383 = vsel %vm265, 1, 0
        %vm384 = vcmp.eq.s32.totalorder %v382, 1
        %vm385 = vcmp.eq.s32.totalorder %v383, 1
        %v386 = vsel %vm384, %v380, 0.0
        %v387 = vsel %vm385, %v378, 0.0
        %v388 = vsel %vm384, %v381, 0.0
        %v389 = vsel %vm385, %v379, 0.0
        %390 = vst [vmem:[#allocation2 + $0x60] sm:$0xff] %v386
        %391 = vst [vmem:[#allocation2 + $0x68] sm:$0xff] %v387
        %392 = vst [vmem:[#allocation2 + $0x70] sm:$0xff] %v388
        %393 = vst [vmem:[#allocation2 + $0x78] sm:$0xff] %v389
        %394 = vrot.lane.b32.xlu0 %v290, 127
        %v395 = vpop.permute.xlu0 %394
        %396 = vrot.lane.b32.xlu0 %v292, 127
        %v397 = vpop.permute.xlu0 %396
        %398 = vrot.lane.b32.xlu0 %v291, 127
        %v399 = vpop.permute.xlu0 %398
        %400 = vrot.lane.b32.xlu0 %v293, 127
        %v401 = vpop.permute.xlu0 %400
        %vm402 = vcmp.lt.s32.totalorder %v236, 127
        %v403 = vsel %vm402, %v395, %v399
        %v404 = vsel %vm402, %v397, %v401
        %v405 = vsel %vm402, %v399, %v395
        %v406 = vsel %vm402, %v401, %v397
        %v407 = vsel %vm268, 1, 0
        %v408 = vsel %vm269, 1, 0
        %vm409 = vcmp.eq.s32.totalorder %v407, 1
        %vm410 = vcmp.eq.s32.totalorder %v408, 1
        %v411 = vsel %vm409, %v403, 0.0
        %v412 = vsel %vm410, %v405, 0.0
        %v413 = vsel %vm409, %v404, 0.0
        %v414 = vsel %vm410, %v406, 0.0
        %415 = vst [vmem:[#allocation2 + $0xa0] sm:$0xff] %v411
        %416 = vst [vmem:[#allocation2 + $0xa8] sm:$0xff] %v412
        %417 = vst [vmem:[#allocation2 + $0xb0] sm:$0xff] %v413
        %418 = vst [vmem:[#allocation2 + $0xb8] sm:$0xff] %v414
        %419 = vrot.lane.b32.xlu0 %v290, 113
        %v420 = vpop.permute.xlu0 %419
        %421 = vrot.lane.b32.xlu0 %v292, 113
        %v422 = vpop.permute.xlu0 %421
        %423 = vrot.lane.b32.xlu0 %v291, 113
        %v424 = vpop.permute.xlu0 %423
        %425 = vrot.lane.b32.xlu0 %v293, 113
        %v426 = vpop.permute.xlu0 %425
        %vm427 = vcmp.lt.s32.totalorder %v236, 113
        %v428 = vsel %vm427, %v420, %v424
        %v429 = vsel %vm427, %v422, %v426
        %v430 = vsel %vm427, %v424, %v420
        %v431 = vsel %vm427, %v426, %v422
        %v432 = vsel %vm274, 1, 0
        %v433 = vsel %vm275, 1, 0
        %vm434 = vcmp.eq.s32.totalorder %v432, 1
        %vm435 = vcmp.eq.s32.totalorder %v433, 1
        %v436 = vsel %vm434, %v428, 0.0
        %v437 = vsel %vm435, %v430, 0.0
        %v438 = vsel %vm434, %v429, 0.0
        %v439 = vsel %vm435, %v431, 0.0
        %440 = vst [vmem:[#allocation2 + $0xc0] sm:$0xff] %v436
        %441 = vst [vmem:[#allocation2 + $0xc8] sm:$0xff] %v437
        %442 = vst [vmem:[#allocation2 + $0xd0] sm:$0xff] %v438
        %443 = vst [vmem:[#allocation2 + $0xd8] sm:$0xff] %v439
        %444 = vrot.lane.b32.xlu0 %v290, 112
        %v445 = vpop.permute.xlu0 %444
        %446 = vrot.lane.b32.xlu0 %v292, 112
        %v447 = vpop.permute.xlu0 %446
        %448 = vrot.lane.b32.xlu0 %v291, 112
        %v449 = vpop.permute.xlu0 %448
        %450 = vrot.lane.b32.xlu0 %v293, 112
        %v451 = vpop.permute.xlu0 %450
        %vm452 = vcmp.lt.s32.totalorder %v236, 112
        %v453 = vsel %vm452, %v445, %v449
        %v454 = vsel %vm452, %v447, %v451
        %v455 = vsel %vm452, %v449, %v445
        %v456 = vsel %vm452, %v451, %v447
        %v457 = vsel %vm272, 1, 0
        %v458 = vsel %vm273, 1, 0
        %vm459 = vcmp.eq.s32.totalorder %v457, 1
        %vm460 = vcmp.eq.s32.totalorder %v458, 1
        %v461 = vsel %vm459, %v453, 0.0
        %v462 = vsel %vm460, %v455, 0.0
        %v463 = vsel %vm459, %v454, 0.0
        %v464 = vsel %vm460, %v456, 0.0
        %465 = vst [vmem:[#allocation2 + $0xe0] sm:$0xff] %v461
        %466 = vst [vmem:[#allocation2 + $0xe8] sm:$0xff] %v462
        %467 = vst [vmem:[#allocation2 + $0xf0] sm:$0xff] %v463
        %468 = vst [vmem:[#allocation2 + $0xf8] sm:$0xff] %v464
        %469 = vrot.lane.b32.xlu0 %v290, 111
        %v470 = vpop.permute.xlu0 %469
        %471 = vrot.lane.b32.xlu0 %v292, 111
        %v472 = vpop.permute.xlu0 %471
        %473 = vrot.lane.b32.xlu0 %v291, 111
        %v474 = vpop.permute.xlu0 %473
        %475 = vrot.lane.b32.xlu0 %v293, 111
        %v476 = vpop.permute.xlu0 %475
        %vm477 = vcmp.lt.s32.totalorder %v236, 111
        %v478 = vsel %vm477, %v470, %v474
        %v479 = vsel %vm477, %v472, %v476
        %v480 = vsel %vm477, %v474, %v470
        %v481 = vsel %vm477, %v476, %v472
        %v482 = vsel %vm276, 1, 0
        %v483 = vsel %vm277, 1, 0
        %vm484 = vcmp.eq.s32.totalorder %v482, 1
        %vm485 = vcmp.eq.s32.totalorder %v483, 1
        %v486 = vsel %vm484, %v478, 0.0
        %v487 = vsel %vm485, %v480, 0.0
        %v488 = vsel %vm484, %v479, 0.0
        %v489 = vsel %vm485, %v481, 0.0
        %490 = vst [vmem:[#allocation2 + $0x100] sm:$0xff] %v486
        %491 = vst [vmem:[#allocation2 + $0x108] sm:$0xff] %v487
        %492 = vst [vmem:[#allocation2 + $0x110] sm:$0xff] %v488
        %493 = vst [vmem:[#allocation2 + $0x118] sm:$0xff] %v489
        %v494 = vlaneseq
        %vm495 = vcmp.ge.s32.totalorder %v494, 0
        %vm496 = vcmp.lt.s32.totalorder %v494, 256
        %vm497 = vmand %vm495, %vm496
        %s498 = scalar_lea.vmem [#allocation2], 4
        %499 = vst.msk [vmem:[%s498] ss:$8 sm:$0x3] %vm497, 1.0
        %500 = vst.msk [vmem:[%s498] ss:$8 sm:$0x0] %vm497, 1.0
        %v501 = vld [vmem:[#allocation3] sm:$0xff]
        %v502 = vld [vmem:[#allocation3 + $0x8] sm:$0xff]
        %v503 = vld [vmem:[#allocation2] sm:$0xff]
        %v504 = vld [vmem:[#allocation2 + $0x8] sm:$0xff]
        %v505 = vld [vmem:[#allocation2 + $0x10] sm:$0xff]
        %v506 = vld [vmem:[#allocation2 + $0x18] sm:$0xff]
        %v507 = vld [vmem:[#allocation2 + $0x20] sm:$0xff]
        %v508 = vld [vmem:[#allocation2 + $0x28] sm:$0xff]
        %v509 = vld [vmem:[#allocation2 + $0x30] sm:$0xff]
        %v510 = vld [vmem:[#allocation2 + $0x38] sm:$0xff]
        %v511 = vld [vmem:[#allocation2 + $0x40] sm:$0xff]
        %v512 = vld [vmem:[#allocation2 + $0x48] sm:$0xff]
        %v513 = vld [vmem:[#allocation2 + $0x50] sm:$0xff]
        %v514 = vld [vmem:[#allocation2 + $0x58] sm:$0xff]
        %v515 = vld [vmem:[#allocation2 + $0x60] sm:$0xff]
        %v516 = vld [vmem:[#allocation2 + $0x68] sm:$0xff]
        %v517 = vld [vmem:[#allocation2 + $0x70] sm:$0xff]
        %v518 = vld [vmem:[#allocation2 + $0x78] sm:$0xff]
        %v519 = vld [vmem:[#allocation2 + $0x80] sm:$0xff]
        %v520 = vld [vmem:[#allocation2 + $0x88] sm:$0xff]
        %v521 = vld [vmem:[#allocation2 + $0x90] sm:$0xff]
        %v522 = vld [vmem:[#allocation2 + $0x98] sm:$0xff]
        %v523 = vld [vmem:[#allocation2 + $0xa0] sm:$0xff]
        %v524 = vld [vmem:[#allocation2 + $0xa8] sm:$0xff]
        %v525 = vld [vmem:[#allocation2 + $0xb0] sm:$0xff]
        %v526 = vld [vmem:[#allocation2 + $0xb8] sm:$0xff]
        %v527 = vld [vmem:[#allocation2 + $0xc0] sm:$0xff]
        %v528 = vld [vmem:[#allocation2 + $0xc8] sm:$0xff]
        %v529 = vld [vmem:[#allocation2 + $0xd0] sm:$0xff]
        %v530 = vld [vmem:[#allocation2 + $0xd8] sm:$0xff]
        %v531 = vld [vmem:[#allocation2 + $0xe0] sm:$0xff]
        %v532 = vld [vmem:[#allocation2 + $0xe8] sm:$0xff]
        %v533 = vld [vmem:[#allocation2 + $0xf0] sm:$0xff]
        %v534 = vld [vmem:[#allocation2 + $0xf8] sm:$0xff]
        %v535 = vld [vmem:[#allocation2 + $0x100] sm:$0xff]
        %v536 = vld [vmem:[#allocation2 + $0x108] sm:$0xff]
        %v537 = vld [vmem:[#allocation2 + $0x110] sm:$0xff]
        %v538 = vld [vmem:[#allocation2 + $0x118] sm:$0xff]
        %vm539 = vcmask 130048
        %v541 = vsel %vm539, %v502, 0
        %543 = vmatprep.subr.mxu0 %v504
        %544 = vmatpush1.msra.mxu0 %v503
        %545 = vmatprep.subr.mxu0 %v506
        %546 = vmatpush1.msra.mxu0 %v505
        %547 = vmatprep.subr.mxu0 %v508
        %548 = vmatpush1.msra.mxu0 %v507
        %549 = vmatprep.subr.mxu0 %v510
        %550 = vmatpush1.msra.mxu0 %v509
        %551 = vmatprep.subr.mxu0 %v512
        %552 = vmatpush1.msra.mxu0 %v511
        %553 = vmatprep.subr.mxu0 %v514
        %554 = vmatpush1.msra.mxu0 %v513
        %555 = vmatprep.subr.mxu0 %v516
        %556 = vmatpush1.msra.mxu0 %v515
        %557 = vmatprep.subr.mxu0 %v518
        %558 = vmatpush1.msra.mxu0 %v517
        %559 = vmatprep.subr.mxu0 %v520
        %560 = vmatpush1.msra.mxu0 %v519
        %561 = vmatprep.subr.mxu0 %v522
        %562 = vmatpush1.msra.mxu0 %v521
        %563 = vmatprep.subr.mxu0 %v524
        %564 = vmatpush1.msra.mxu0 %v523
        %565 = vmatprep.subr.mxu0 %v526
        %566 = vmatpush1.msra.mxu0 %v525
        %567 = vmatprep.subr.mxu0 %v528
        %568 = vmatpush1.msra.mxu0 %v527
        %569 = vmatprep.subr.mxu0 %v530
        %570 = vmatpush1.msra.mxu0 %v529
        %571 = vmatprep.subr.mxu0 %v532
        %572 = vmatpush1.msra.mxu0 %v531
        %573 = vmatprep.subr.mxu0 %v534
        %574 = vmatpush1.msra.mxu0 %v533
        %575 = vmatprep.subr.mxu0 %v536
        %576 = vmatpush1.msra.mxu0 %v535
        %577 = vmatprep.subr.mxu0 %v538
        %578 = vmatpush1.msra.mxu0 %v537
        %579 = vmatprep.subr.mxu0 0.0
        %580 = vmatpush1.msra.mxu0 0.0
        %581 = vmatprep.subr.mxu0 0.0
        %582 = vmatpush1.msra.mxu0 0.0
        %583 = vmatprep.subr.mxu0 0.0
        %584 = vmatpush1.msra.mxu0 0.0
        %585 = vmatprep.subr.mxu0 0.0
        %586 = vmatpush1.msra.mxu0 0.0
        %587 = vmatprep.subr.mxu0 0.0
        %588 = vmatpush1.msra.mxu0 0.0
        %589 = vmatprep.subr.mxu0 0.0
        %590 = vmatpush1.msra.mxu0 0.0
        %591 = vmatprep.subr.mxu0 0.0
        %592 = vmatpush1.msra.mxu0 0.0
        %593 = vmatprep.subr.mxu0 0.0
        %594 = vmatpush1.msra.mxu0 0.0
        %595 = vmatprep.subr.mxu0 0.0
        %596 = vmatpush1.msra.mxu0 0.0
        %597 = vmatprep.subr.mxu0 0.0
        %598 = vmatpush1.msra.mxu0 0.0
        %599 = vmatprep.subr.mxu0 0.0
        %600 = vmatpush1.msra.mxu0 0.0
        %601 = vmatprep.subr.mxu0 0.0
        %602 = vmatpush1.msra.mxu0 0.0
        %603 = vmatprep.subr.mxu0 0.0
        %604 = vmatpush1.msra.mxu0 0.0
        %605 = vmatprep.subr.mxu0 0.0
        %606 = vmatpush1.msra.mxu0 0.0
        %607 = vmatprep.mubr.f32.mxu0 %v541
        %608 = vmatmul.mubr.f32.gmra.mrb[0].mxu0 %v501
        %v609 = vpop.f32.mrb[0].mxu0
        %v610 = vadd.f32 0.0, %v609
        %v611 = vpop.f32.mrb[0].mxu0
        %v612 = vadd.f32 0.0, %v611
        %613 = vdwg.mxu0
        %v614 = vtanh.pop %v610
        %v615 = vtanh.pop %v612
        %616 = vst [vmem:[%s234] sm:$0xff] %v614
        %617 = vst [vmem:[%s234 + $0x8] sm:$0xff] %v615
        %s618 = sand.u32 %s102, 1
        %s619 = scalar_lea.sflag [#allocation5], %s618
        %s620 = sand.u32 %s102, 1
        %s621 = smul.addr %s620, 16
        %s622 = scalar_lea.vmem [#allocation9], %s621
        // Predicated region
        $region45: #{tpu_custom_call.1} parent=31 // pred_check
          %p623 = pneg %p112
        $region46: #{tpu_custom_call.1} parent=31 // pred_check_branch
          %625 = sbr.rel (%p623) target = $region48
        $region47: #{tpu_custom_call.1} parent=31 // pred_region
          %s627 = ssub.s32 256, 256
          %628 = vsyncadd %s619, %s627
          %s629 = smul.addr %s21, 2
          %s630 = smul.addr %s629, 128
          %s631 = scalar_lea.hbm %s3, %s630
          %s633 = sshll.u32 %s622, 4
          %s634 = int_to_ptr.vmem [resolvable:$true] %s633
          %636 = dma.vmem_to_hbm [thread:$0]  %s634, 256, %s631, %s619
        $region48: #{tpu_custom_call.1} parent=31 // pred_fallthru
          _
      $region32: #{tpu_custom_call.1} parent=5 // pred_fallthru
        _
      %p637 = scmp.le.s32.totalorder 2, %s16
      // Predicated region
      $region49: #{tpu_custom_call.1} parent=5 // pred_check
        %p638 = pneg %p637
      $region50: #{tpu_custom_call.1} parent=5 // pred_check_branch
        %640 = sbr.rel (%p638) target = $region52
      $region51: #{tpu_custom_call.1} parent=5 // pred_region
        %s641 = ssub.s32 %s16, 2
        // Predicated region
        $region53: #{tpu_custom_call.1} parent=51 // pred_check
          %p642 = pneg %p118
        $region54: #{tpu_custom_call.1} parent=51 // pred_check_branch
          %644 = sbr.rel (%p642) target = $region56
        $region55: #{tpu_custom_call.1} parent=51 // pred_region
          %s645 = sand.u32 %s103, 1
          %s646 = scalar_lea.sflag [#allocation5], %s645
          %s647 = sand.u32 %s103, 1
          %s648 = smul.addr %s647, 16
          %s649 = scalar_lea.vmem [#allocation9], %s648
          %650 = dma.done %s646, 256
        $region56: #{tpu_custom_call.1} parent=51 // pred_fallthru
          _
      $region52: #{tpu_custom_call.1} parent=5 // pred_fallthru
        _
    $region6: #{tpu_custom_call.1} parent=1 // loop_footer
      %s20 = sadd.s32 1, %s16
    $region7: #{tpu_custom_call.1} parent=1 // loop_footer_branch
      %15 = sbr.rel target = $region3
    $region8: #{tpu_custom_call.1} parent=1 // loop_exit
      _
    %651 = vsyncpa [#allocation4], 1
    %s652 = scalar_lea.sflag [#allocation4], 1
    %653 = vsyncpa %s652, 1
    %654 = vsyncpa [#allocation7], 1
    %s655 = scalar_lea.sflag [#allocation7], 1
    %656 = vsyncpa %s655, 1
    %657 = vsyncpa [#allocation5], 1
    %s658 = scalar_lea.sflag [#allocation5], 1
    %659 = vsyncpa %s658, 1

</llo_original>
